<compile_context>
chip_gen: v7x
topology: tpu7x:2x2x1
jax: 0.10.0
libtpu: 0.0.40
codegen_flags: <defaults>
</compile_context>

<pallas_src>
import functools
import math

import jax
import jax.numpy as jnp
from jax.experimental import pallas as pl
from jax.experimental.pallas import tpu as pltpu


_LANE = 512            # lane width of each tile (multiple of 128)
_MAX_TILE_ROWS = 512   # sublane rows per tile -> 512*512*4B = 1 MiB f32 tile
_PRED_PAD = -30000.0   # sigmoid(pad) == 0.0 exactly in f32 (finite in bf16/fp16)


def _round_up(x, m):
    return ((x + m - 1) // m) * m


def _soft_dice_kernel(pred_ref, gt_ref, dice_ref, tp_acc_ref, un_acc_ref, *, eps):
    """Grid = (N, num_row_tiles).  Block refs:
         pred_ref, gt_ref : (tile_rows, LANE)  one D-tile of one sample
         dice_ref         : (8, 128)           per-sample dice (broadcast-filled)
         tp_acc_ref       : (1, LANE) f32      running sum of sigmoid(pred) * gt
         un_acc_ref       : (1, LANE) f32      running sum of sigmoid(pred) + gt
    """
    j = pl.program_id(1)

    @pl.when(j == 0)
    def _init():
        tp_acc_ref[...] = jnp.zeros_like(tp_acc_ref)
        un_acc_ref[...] = jnp.zeros_like(un_acc_ref)

    p = jax.nn.sigmoid(pred_ref[...].astype(jnp.float32))
    g = gt_ref[...].astype(jnp.float32)

    # Reduce the sublane axis each step; accumulate lane-wise in f32.
    tp_acc_ref[...] += jnp.sum(p * g, axis=0, keepdims=True)
    # 2*tp + fp + fn == pred_sum + gt_sum, so only one extra accumulator needed.
    un_acc_ref[...] += jnp.sum(p + g, axis=0, keepdims=True)

    @pl.when(j == pl.num_programs(1) - 1)
    def _finalize():
        tp = jnp.sum(tp_acc_ref[...])
        union = jnp.sum(un_acc_ref[...])
        dice = (2.0 * tp + eps) / (union + eps)
        dice_ref[...] = jnp.broadcast_to(dice, dice_ref.shape)


def soft_dice_loss(y_pr, y_gt, eps=1e-05):
    """SoftDiceLoss.forward (activation='sigmoid', diceCoeffv2). Returns scalar."""
    assert y_pr.shape == y_gt.shape
    n = y_pr.shape[0]
    d = math.prod(y_pr.shape[1:])

    # Lane-dense per-sample slab: (rows, lane) with lane a multiple of 128.
    lane = _LANE if d >= _LANE else _round_up(d, 128)
    rows = -(-d // lane)
    if rows <= 8:
        tile_rows = rows                 # block == full dim: no 8/16 divisibility needed
        rows_pad = rows
    else:
        tile_rows = min(_MAX_TILE_ROWS, _round_up(rows, 16))
        rows_pad = _round_up(rows, tile_rows)
    d_pad = rows_pad * lane
    num_d_tiles = rows_pad // tile_rows

    pred_flat = y_pr.reshape(n, d)
    gt_flat = y_gt.reshape(n, d)
    if d_pad != d:
        # pred padded with a very negative value (sigmoid -> 0), gt with 0, so
        # the padded tail contributes nothing to tp / pred_sum / gt_sum.
        pred_flat = jnp.pad(pred_flat, ((0, 0), (0, d_pad - d)),
                            constant_values=_PRED_PAD)
        gt_flat = jnp.pad(gt_flat, ((0, 0), (0, d_pad - d)))
    pred3 = pred_flat.reshape(n, rows_pad, lane)
    gt3 = gt_flat.reshape(n, rows_pad, lane)

    kernel = functools.partial(_soft_dice_kernel, eps=eps)

    dice_out = pl.pallas_call(
        kernel,
        out_shape=jax.ShapeDtypeStruct((n, 8, 128), jnp.float32),
        grid_spec=pltpu.PrefetchScalarGridSpec(
            num_scalar_prefetch=0,
            grid=(n, num_d_tiles),
            in_specs=[
                pl.BlockSpec((None, tile_rows, lane), lambda i, j: (i, j, 0)),
                pl.BlockSpec((None, tile_rows, lane), lambda i, j: (i, j, 0)),
            ],
            out_specs=pl.BlockSpec((None, 8, 128), lambda i, j: (i, 0, 0)),
            scratch_shapes=[
                pltpu.VMEM((1, lane), jnp.float32),   # tp accumulator
                pltpu.VMEM((1, lane), jnp.float32),   # pred_sum + gt_sum accumulator
            ],
        ),
        compiler_params=pltpu.CompilerParams(
            dimension_semantics=("parallel", "arbitrary"),
            vmem_limit_bytes=32 * 1024 * 1024,
        ),
    )(pred3, gt3)

    dice = dice_out[:, 0, 0]                 # (N,) per-sample dice
    return 1.0 - jnp.sum(dice) / n


def soft_dice_loss_ref(y_pr, y_gt, eps=1e-05):
    """Pure-JAX reference mirroring diceCoeffv2 with sigmoid activation."""
    n = y_pr.shape[0]
    p = jax.nn.sigmoid(y_pr.reshape(n, -1).astype(jnp.float32))
    g = y_gt.reshape(n, -1).astype(jnp.float32)
    tp = jnp.sum(p * g, axis=1)
    union = jnp.sum(p, axis=1) + jnp.sum(g, axis=1)   # == 2*tp + fp + fn
    dice = (2.0 * tp + eps) / (union + eps)
    return 1.0 - jnp.sum(dice) / n


if __name__ == "__main__":
    key = jax.random.PRNGKey(0)
    k1, k2 = jax.random.split(key)
    N, C, H, W = 2, 4, 16, 16
    y_pr = jax.random.normal(k1, (N, C, H, W), dtype=jnp.float32)
    y_gt = (jax.random.uniform(k2, (N, C, H, W)) > 0.5).astype(jnp.float32)

    # f32 inputs
    loss = soft_dice_loss(y_pr, y_gt)
    jax.block_until_ready(loss)
    ref = soft_dice_loss_ref(y_pr, y_gt)
    assert jnp.allclose(loss, ref, atol=1e-5, rtol=1e-4), (loss, ref)

    # bf16 inputs (half the HBM traffic) -- accumulation stays f32 in-kernel.
    loss_bf16 = soft_dice_loss(y_pr.astype(jnp.bfloat16), y_gt.astype(jnp.bfloat16))
    jax.block_until_ready(loss_bf16)
    ref_bf16 = soft_dice_loss_ref(y_pr.astype(jnp.bfloat16), y_gt.astype(jnp.bfloat16))
    assert jnp.allclose(loss_bf16, ref_bf16, atol=1e-4, rtol=1e-3), (loss_bf16, ref_bf16)

    # odd, non-tile-aligned shape to exercise the padded-tail path
    k3, k4 = jax.random.split(k1)
    y_pr_odd = jax.random.normal(k3, (2, 3, 5, 7), dtype=jnp.float32)
    y_gt_odd = (jax.random.uniform(k4, (2, 3, 5, 7)) > 0.5).astype(jnp.float32)
    loss_odd = soft_dice_loss(y_pr_odd, y_gt_odd)
    jax.block_until_ready(loss_odd)
    ref_odd = soft_dice_loss_ref(y_pr_odd, y_gt_odd)
    assert jnp.allclose(loss_odd, ref_odd, atol=1e-5, rtol=1e-4), (loss_odd, ref_odd)

    print("KERNEL_OK")
</pallas_src>

<mosaic_0001>
module attributes {stable_mosaic.version = 11 : i64} {
  func.func @_soft_dice_kernel(%arg0: i32, %arg1: i32, %arg2: memref<1x2x512xf32, #tpu.memory_space<vmem>>, %arg3: memref<1x2x512xf32, #tpu.memory_space<vmem>>, %arg4: memref<1x8x128xf32, #tpu.memory_space<vmem>>, %arg5: memref<1x512xf32, #tpu.memory_space<vmem>>, %arg6: memref<1x512xf32, #tpu.memory_space<vmem>>) attributes {dimension_semantics = [#tpu.dimension_semantics<parallel>, #tpu.dimension_semantics<arbitrary>], iteration_bounds = array<i64: 2, 1>, scalar_prefetch = 0 : i64, scratch_operands = 2 : i64, tpu.core_type = #tpu.core_type<tc>, window_params = [{transform_indices = @transform_0, window_bounds = array<i64: 1, 2, 512>}, {transform_indices = @transform_1, window_bounds = array<i64: 1, 2, 512>}, {transform_indices = @transform_2, window_bounds = array<i64: 1, 8, 128>}]} {
    %c0_i32 = arith.constant 0 : i32
    %0 = arith.cmpi eq, %arg1, %c0_i32 : i32
    %1 = arith.extui %0 : i1 to i32
    %c0_i32_0 = arith.constant 0 : i32
    %2 = arith.cmpi ne, %1, %c0_i32_0 : i32
    scf.if %2 {
      %cst_18 = arith.constant 0.000000e+00 : f32
      %27 = vector.broadcast %cst_18 : f32 to vector<1x512xf32>
      %c0_19 = arith.constant 0 : index
      %c0_20 = arith.constant 0 : index
      %28 = vector.load %arg5[%c0_19, %c0_20] : memref<1x512xf32, #tpu.memory_space<vmem>>, vector<1x512xf32>
      tpu.vector_store %arg5[%c0_19, %c0_20], %27 {strides = array<i32>} : memref<1x512xf32, #tpu.memory_space<vmem>>, vector<1x512xf32>,
      %cst_21 = arith.constant 0.000000e+00 : f32
      %29 = vector.broadcast %cst_21 : f32 to vector<1x512xf32>
      %c0_22 = arith.constant 0 : index
      %c0_23 = arith.constant 0 : index
      %30 = vector.load %arg6[%c0_22, %c0_23] : memref<1x512xf32, #tpu.memory_space<vmem>>, vector<1x512xf32>
      tpu.vector_store %arg6[%c0_22, %c0_23], %29 {strides = array<i32>} : memref<1x512xf32, #tpu.memory_space<vmem>>, vector<1x512xf32>,
    } else {
    }
    %c0 = arith.constant 0 : index
    %c0_1 = arith.constant 0 : index
    %c0_2 = arith.constant 0 : index
    %3 = vector.load %arg2[%c0, %c0_1, %c0_2] : memref<1x2x512xf32, #tpu.memory_space<vmem>>, vector<1x2x512xf32>
    %4 = vector.shape_cast %3 : vector<1x2x512xf32> to vector<2x512xf32>
    %5 = arith.negf %4 : vector<2x512xf32>
    %6 = math.exp %5 : vector<2x512xf32>
    %cst = arith.constant 1.000000e+00 : f32
    %7 = vector.broadcast %cst : f32 to vector<2x512xf32>
    %8 = arith.addf %7, %6 : vector<2x512xf32>
    %9 = arith.divf %7, %8 : vector<2x512xf32>
    %c0_3 = arith.constant 0 : index
    %c0_4 = arith.constant 0 : index
    %c0_5 = arith.constant 0 : index
    %10 = vector.load %arg3[%c0_3, %c0_4, %c0_5] : memref<1x2x512xf32, #tpu.memory_space<vmem>>, vector<1x2x512xf32>
    %11 = vector.shape_cast %10 : vector<1x2x512xf32> to vector<2x512xf32>
    %c0_6 = arith.constant 0 : index
    %c0_7 = arith.constant 0 : index
    %12 = vector.load %arg5[%c0_6, %c0_7] : memref<1x512xf32, #tpu.memory_space<vmem>>, vector<1x512xf32>
    %13 = arith.mulf %9, %11 : vector<2x512xf32>
    %cst_8 = arith.constant dense<0.000000e+00> : vector<512xf32>
    %14 = vector.multi_reduction <add>, %13, %cst_8 [0] : vector<2x512xf32> to vector<512xf32>
    %15 = vector.shape_cast %14 : vector<512xf32> to vector<1x512xf32>
    %16 = arith.addf %12, %15 : vector<1x512xf32>
    %c0_9 = arith.constant 0 : index
    %c0_10 = arith.constant 0 : index
    %17 = vector.load %arg5[%c0_9, %c0_10] : memref<1x512xf32, #tpu.memory_space<vmem>>, vector<1x512xf32>
    tpu.vector_store %arg5[%c0_9, %c0_10], %16 {strides = array<i32>} : memref<1x512xf32, #tpu.memory_space<vmem>>, vector<1x512xf32>,
    %c0_11 = arith.constant 0 : index
    %c0_12 = arith.constant 0 : index
    %18 = vector.load %arg6[%c0_11, %c0_12] : memref<1x512xf32, #tpu.memory_space<vmem>>, vector<1x512xf32>
    %19 = arith.addf %9, %11 : vector<2x512xf32>
    %cst_13 = arith.constant dense<0.000000e+00> : vector<512xf32>
    %20 = vector.multi_reduction <add>, %19, %cst_13 [0] : vector<2x512xf32> to vector<512xf32>
    %21 = vector.shape_cast %20 : vector<512xf32> to vector<1x512xf32>
    %22 = arith.addf %18, %21 : vector<1x512xf32>
    %c0_14 = arith.constant 0 : index
    %c0_15 = arith.constant 0 : index
    %23 = vector.load %arg6[%c0_14, %c0_15] : memref<1x512xf32, #tpu.memory_space<vmem>>, vector<1x512xf32>
    tpu.vector_store %arg6[%c0_14, %c0_15], %22 {strides = array<i32>} : memref<1x512xf32, #tpu.memory_space<vmem>>, vector<1x512xf32>,
    %c0_i32_16 = arith.constant 0 : i32
    %24 = arith.cmpi eq, %arg1, %c0_i32_16 : i32
    %25 = arith.extui %24 : i1 to i32
    %c0_i32_17 = arith.constant 0 : i32
    %26 = arith.cmpi ne, %25, %c0_i32_17 : i32
    scf.if %26 {
      %c0_18 = arith.constant 0 : index
      %c0_19 = arith.constant 0 : index
      %27 = vector.load %arg5[%c0_18, %c0_19] : memref<1x512xf32, #tpu.memory_space<vmem>>, vector<1x512xf32>
      %28 = vector.shape_cast %27 : vector<1x512xf32> to vector<1x1x512xf32>
      %cst_20 = arith.constant dense<0.000000e+00> : vector<1xf32>
      %29 = vector.multi_reduction <add>, %28, %cst_20 [1, 2] : vector<1x1x512xf32> to vector<1xf32>
      %30 = vector.shape_cast %29 : vector<1xf32> to vector<1x1x1xf32>
      %31 = vector.extract %30[0, 0, 0] : f32 from vector<1x1x1xf32>
      %c0_21 = arith.constant 0 : index
      %c0_22 = arith.constant 0 : index
      %32 = vector.load %arg6[%c0_21, %c0_22] : memref<1x512xf32, #tpu.memory_space<vmem>>, vector<1x512xf32>
      %33 = vector.shape_cast %32 : vector<1x512xf32> to vector<1x1x512xf32>
      %cst_23 = arith.constant dense<0.000000e+00> : vector<1xf32>
      %34 = vector.multi_reduction <add>, %33, %cst_23 [1, 2] : vector<1x1x512xf32> to vector<1xf32>
      %35 = vector.shape_cast %34 : vector<1xf32> to vector<1x1x1xf32>
      %36 = vector.extract %35[0, 0, 0] : f32 from vector<1x1x1xf32>
      %cst_24 = arith.constant 2.000000e+00 : f32
      %37 = arith.mulf %cst_24, %31 : f32
      %cst_25 = arith.constant 9.99999974E-6 : f32
      %38 = arith.addf %37, %cst_25 : f32
      %cst_26 = arith.constant 9.99999974E-6 : f32
      %39 = arith.addf %36, %cst_26 : f32
      %40 = arith.divf %38, %39 : f32
      %41 = vector.broadcast %40 : f32 to vector<8x128xf32>
      %c0_27 = arith.constant 0 : index
      %c0_28 = arith.constant 0 : index
      %c0_29 = arith.constant 0 : index
      %42 = vector.load %arg4[%c0_27, %c0_28, %c0_29] : memref<1x8x128xf32, #tpu.memory_space<vmem>>, vector<1x8x128xf32>
      %43 = vector.shape_cast %42 : vector<1x8x128xf32> to vector<8x128xf32>
      %44 = vector.shape_cast %41 : vector<8x128xf32> to vector<1x8x128xf32>
      tpu.vector_store %arg4[%c0_27, %c0_28, %c0_29], %44 {strides = array<i32>} : memref<1x8x128xf32, #tpu.memory_space<vmem>>, vector<1x8x128xf32>,
    } else {
    }
    return
  }
  func.func @transform_0(%arg0: i32, %arg1: i32) -> (i32, i32, i32) {
    %c0_i32 = arith.constant 0 : i32
    %c0_i32_0 = arith.constant 0 : i32
    return %arg0, %arg1, %c0_i32 : i32, i32, i32
  }
  func.func @transform_1(%arg0: i32, %arg1: i32) -> (i32, i32, i32) {
    %c0_i32 = arith.constant 0 : i32
    %c0_i32_0 = arith.constant 0 : i32
    return %arg0, %arg1, %c0_i32 : i32, i32, i32
  }
  func.func @transform_2(%arg0: i32, %arg1: i32) -> (i32, i32, i32) {
    %c0_i32 = arith.constant 0 : i32
    %c0_i32_0 = arith.constant 0 : i32
    %c0_i32_1 = arith.constant 0 : i32
    return %arg0, %c0_i32, %c0_i32_0 : i32, i32, i32
  }
}

</mosaic_0001>

<llo_original>
// kernel: tpu_custom_call.1
$region0: #{tpu_custom_call.1}
  #allocation0 [shape = 'u32[]', space=smem, size = 0x4, offset = 0x4, fixed_abs, tag = 'smem constant byte address 0x4 - core index']
  #allocation1 [shape = 'u32[144,128]{1,0:T(1,128)}', space=vmem, size = 0x12000, scoped, tag = 'internal scratch']
  #allocation2 [shape = 'f32[1,512]{1,0:T(1,128)}', space=vmem, size = 0x800, scoped, tag = 'scratch operand']
  #allocation3 [shape = 'f32[1,512]{1,0:T(1,128)}', space=vmem, size = 0x800, scoped, tag = 'scratch operand']
  %s0 = inlined_call_operand.hbm [shape: f32[2,2,512], index: 0, kind: input, shape index: {}]
  %s1 = inlined_call_operand.hbm [shape: f32[2,2,512], index: 1, kind: input, shape index: {}]
  %s2 = inlined_call_operand.hbm [shape: f32[2,8,128], index: 2, kind: output, shape index: {}]
  %s3 = sld [smem:[#allocation0]]
  $region57: #{tpu_custom_call.1} parent=0
    _
  %s5 = ssub.s32 1, %s3
  %s6 = scalar_select 0, %s5, %s3
  $region1: #{tpu_custom_call.1} parent=0
    #allocation4 [shape = 'u8[8192]{0}', space=vmem, size = 0x2000, scoped, tag = 'input window, operand 0']
    #allocation5 [shape = 's32[2]{0}', space=sflag, size = 0x8, scoped, tag = 'scoped memory for tpu_custom_call.1']
    #allocation6 [shape = 's32[2]{0}', space=sflag, size = 0x8, scoped, tag = 'scoped memory for tpu_custom_call.1']
    #allocation7 [shape = 'u8[8192]{0}', space=vmem, size = 0x2000, scoped, tag = 'input window, operand 1']
    #allocation8 [shape = 's32[2]{0}', space=sflag, size = 0x8, scoped, tag = 'scoped memory for tpu_custom_call.1']
    #allocation9 [shape = 'u8[8192]{0}', space=vmem, size = 0x2000, scoped, tag = 'output window, operand 0']
    %7 = vsyncpa [#allocation5], 0
    %s8 = scalar_lea.sflag [#allocation5], 1
    %9 = vsyncpa %s8, 0
    %10 = vsyncpa [#allocation8], 0
    %s11 = scalar_lea.sflag [#allocation8], 1
    %12 = vsyncpa %s11, 0
    %13 = vsyncpa [#allocation6], 0
    %s14 = scalar_lea.sflag [#allocation6], 1
    %15 = vsyncpa %s14, 0
    loop: start=0, step=1, limit=4
    $region2: #{tpu_custom_call.1} parent=1 // loop_pre_header
      _
    $region3: #{tpu_custom_call.1} parent=1 // loop_header
      %s17 = sphi 0, %s21
      %p18 = scmp.ge.s32.totalorder %s17, 4
      %s24 = sphi 0, %s36
      %s25 = sphi 0, %s32
      %s26 = sphi 0, %s24
      %s27 = sphi 0, %s25
      %s28 = sphi 0, %s26
      %s29 = sphi 0, %s27
      %s41 = sphi 0, %s43
      %s44 = sphi 0, %s41
      %s45 = sphi 0, %s44
      %s61 = sphi 0, %s45
      %s69 = sphi 0, %s71
      %s72 = sphi 0, %s69
      %s73 = sphi 0, %s72
      %s89 = sphi 0, %s73
      %s95 = sphi 0, %s97
      %s98 = sphi 0, %s95
      %s99 = sphi 0, %s98
      %s115 = sphi 0, %s99
    $region4: #{tpu_custom_call.1} parent=1 // loop_header_branch
      %20 = sbr.rel (%p18) target = $region8
    $region5: #{tpu_custom_call.1} parent=1 // loop_body
      %s22 = ssub.s32 %s17, 1
      %s23 = ssub.s32 %s17, 2
      %s30 = sadd.s32 1, %s25
      %p31 = scmp.ge.s32.totalorder %s30, 1
      %s32 = scalar_select %p31, 0, %s30
      %s33 = sadd.s32 1, %s24
      %s34 = scalar_select %p31, %s33, %s24
      %p35 = scmp.ge.s32.totalorder %s34, 2
      %s36 = scalar_select %p35, 0, %s34
      %s37 = ssub.s32 %s24, %s36
      %s38 = ssub.s32 %s25, %s32
      %s39 = sor.u32 %s37, %s38
      %p40 = scmp.eq.s32.totalorder %s39, 0
      %s42 = sadd.s32 %s41, 1
      %s43 = scalar_select %p40, %s41, %s42
      %p46 = pneg %p40
      %p47 = scmp.eq.s32.totalorder %s17, 1
      %p48 = por %p46, %p47
      %p49 = scmp.ne.s32.totalorder %s41, %s44
      %p50 = scmp.eq.s32.totalorder %s17, 0
      %p51 = por %p49, %p50
      %p52 = scmp.ne.s32.totalorder %s41, %s44
      %p53 = scmp.eq.s32.totalorder %s22, 1
      %p54 = por %p52, %p53
      %p55 = scmp.ne.s32.totalorder %s44, %s45
      %p56 = scmp.eq.s32.totalorder %s22, 0
      %p57 = por %p55, %p56
      %p58 = scmp.ne.s32.totalorder %s44, %s45
      %p59 = scmp.eq.s32.totalorder %s23, 1
      %p60 = por %p58, %p59
      %p62 = scmp.ne.s32.totalorder %s45, %s61
      %p63 = scmp.eq.s32.totalorder %s23, 0
      %p64 = por %p62, %p63
      %s65 = ssub.s32 %s24, %s36
      %s66 = ssub.s32 %s25, %s32
      %s67 = sor.u32 %s65, %s66
      %p68 = scmp.eq.s32.totalorder %s67, 0
      %s70 = sadd.s32 %s69, 1
      %s71 = scalar_select %p68, %s69, %s70
      %p74 = pneg %p68
      %p75 = scmp.eq.s32.totalorder %s17, 1
      %p76 = por %p74, %p75
      %p77 = scmp.ne.s32.totalorder %s69, %s72
      %p78 = scmp.eq.s32.totalorder %s17, 0
      %p79 = por %p77, %p78
      %p80 = scmp.ne.s32.totalorder %s69, %s72
      %p81 = scmp.eq.s32.totalorder %s22, 1
      %p82 = por %p80, %p81
      %p83 = scmp.ne.s32.totalorder %s72, %s73
      %p84 = scmp.eq.s32.totalorder %s22, 0
      %p85 = por %p83, %p84
      %p86 = scmp.ne.s32.totalorder %s72, %s73
      %p87 = scmp.eq.s32.totalorder %s23, 1
      %p88 = por %p86, %p87
      %p90 = scmp.ne.s32.totalorder %s73, %s89
      %p91 = scmp.eq.s32.totalorder %s23, 0
      %p92 = por %p90, %p91
      %s93 = ssub.s32 %s24, %s36
      %p94 = scmp.eq.s32.totalorder %s93, 0
      %s96 = sadd.s32 %s95, 1
      %s97 = scalar_select %p94, %s95, %s96
      %p100 = pneg %p94
      %p101 = scmp.eq.s32.totalorder %s17, 1
      %p102 = por %p100, %p101
      %p103 = scmp.ne.s32.totalorder %s95, %s98
      %p104 = scmp.eq.s32.totalorder %s17, 0
      %p105 = por %p103, %p104
      %p106 = scmp.ne.s32.totalorder %s95, %s98
      %p107 = scmp.eq.s32.totalorder %s22, 1
      %p108 = por %p106, %p107
      %p109 = scmp.ne.s32.totalorder %s98, %s99
      %p110 = scmp.eq.s32.totalorder %s22, 0
      %p111 = por %p109, %p110
      %p112 = scmp.ne.s32.totalorder %s98, %s99
      %p113 = scmp.eq.s32.totalorder %s23, 1
      %p114 = por %p112, %p113
      %p116 = scmp.ne.s32.totalorder %s99, %s115
      %p117 = scmp.eq.s32.totalorder %s23, 0
      %p118 = por %p116, %p117
      %p119 = scmp.le.s32.totalorder 1, %s17
      %p120 = scmp.lt.s32.totalorder %s17, 3
      %p121 = pnand %p119, %p120
      %p122 = pneg %p121
      // Predicated region
      $region9: #{tpu_custom_call.1} parent=5 // pred_check
        _
      $region10: #{tpu_custom_call.1} parent=5 // pred_check_branch
        %124 = sbr.rel (%p121) target = $region12
      $region11: #{tpu_custom_call.1} parent=5 // pred_region
        %s125 = ssub.s32 %s17, 1
      $region12: #{tpu_custom_call.1} parent=5 // pred_fallthru
        _
      %p126 = scmp.lt.s32.totalorder %s17, 2
      // Predicated region
      $region13: #{tpu_custom_call.1} parent=5 // pred_check
        %p127 = pneg %p126
      $region14: #{tpu_custom_call.1} parent=5 // pred_check_branch
        %129 = sbr.rel (%p127) target = $region16
      $region15: #{tpu_custom_call.1} parent=5 // pred_region
        // Predicated region
        $region17: #{tpu_custom_call.1} parent=15 // pred_check
          %p130 = pneg %p51
        $region18: #{tpu_custom_call.1} parent=15 // pred_check_branch
          %132 = sbr.rel (%p130) target = $region20
        $region19: #{tpu_custom_call.1} parent=15 // pred_region
          %s133 = sand.u32 %s41, 1
          %s134 = scalar_lea.sflag [#allocation5], %s133
          %s135 = sand.u32 %s41, 1
          %s136 = smul.addr %s135, 8
          %s137 = scalar_lea.vmem [#allocation4], %s136
          %s139 = ssub.s32 128, 128
          %140 = vsyncadd %s134, %s139
          %s141 = smul.addr %s25, 4
          %s142 = smul.addr %s24, 4
          %s143 = sadd.s32 %s141, %s142
          %s144 = smul.addr %s143, 32
          %s145 = scalar_lea.hbm %s0, %s144
          %s147 = sshll.u32 %s137, 4
          %s148 = int_to_ptr.vmem [resolvable:$true] %s147
          %150 = dma.hbm_to_vmem [thread:$0]  %s145, 128, %s148, %s134
        $region20: #{tpu_custom_call.1} parent=15 // pred_fallthru
          _
        // Predicated region
        $region21: #{tpu_custom_call.1} parent=15 // pred_check
          %p151 = pneg %p79
        $region22: #{tpu_custom_call.1} parent=15 // pred_check_branch
          %153 = sbr.rel (%p151) target = $region24
        $region23: #{tpu_custom_call.1} parent=15 // pred_region
          %s154 = sand.u32 %s69, 1
          %s155 = scalar_lea.sflag [#allocation8], %s154
          %s156 = sand.u32 %s69, 1
          %s157 = smul.addr %s156, 8
          %s158 = scalar_lea.vmem [#allocation7], %s157
          %s160 = ssub.s32 128, 128
          %161 = vsyncadd %s155, %s160
          %s162 = smul.addr %s25, 4
          %s163 = smul.addr %s24, 4
          %s164 = sadd.s32 %s162, %s163
          %s165 = smul.addr %s164, 32
          %s166 = scalar_lea.hbm %s1, %s165
          %s168 = sshll.u32 %s158, 4
          %s169 = int_to_ptr.vmem [resolvable:$true] %s168
          %171 = dma.hbm_to_vmem [thread:$0]  %s166, 128, %s169, %s155
        $region24: #{tpu_custom_call.1} parent=15 // pred_fallthru
          _
      $region16: #{tpu_custom_call.1} parent=5 // pred_fallthru
        _
      %p172 = scmp.le.s32.totalorder 1, %s17
      %p173 = scmp.lt.s32.totalorder %s17, 3
      %p174 = pnand %p172, %p173
      %p175 = pneg %p174
      // Predicated region
      $region25: #{tpu_custom_call.1} parent=5 // pred_check
        _
      $region26: #{tpu_custom_call.1} parent=5 // pred_check_branch
        %177 = sbr.rel (%p174) target = $region28
      $region27: #{tpu_custom_call.1} parent=5 // pred_region
        %s178 = ssub.s32 %s17, 1
        %s179 = sand.u32 %s44, 1
        %s180 = scalar_lea.sflag [#allocation5], %s179
        %s181 = sand.u32 %s44, 1
        %s182 = smul.addr %s181, 8
        %s183 = scalar_lea.vmem [#allocation4], %s182
        // Predicated region
        $region29: #{tpu_custom_call.1} parent=27 // pred_check
          %p184 = pneg %p57
        $region30: #{tpu_custom_call.1} parent=27 // pred_check_branch
          %186 = sbr.rel (%p184) target = $region32
        $region31: #{tpu_custom_call.1} parent=27 // pred_region
          %187 = dma.done %s180, 128
        $region32: #{tpu_custom_call.1} parent=27 // pred_fallthru
          _
        %s188 = sand.u32 %s72, 1
        %s189 = scalar_lea.sflag [#allocation8], %s188
        %s190 = sand.u32 %s72, 1
        %s191 = smul.addr %s190, 8
        %s192 = scalar_lea.vmem [#allocation7], %s191
        // Predicated region
        $region33: #{tpu_custom_call.1} parent=27 // pred_check
          %p193 = pneg %p85
        $region34: #{tpu_custom_call.1} parent=27 // pred_check_branch
          %195 = sbr.rel (%p193) target = $region36
        $region35: #{tpu_custom_call.1} parent=27 // pred_region
          %196 = dma.done %s189, 128
        $region36: #{tpu_custom_call.1} parent=27 // pred_fallthru
          _
        %s197 = sand.u32 %s44, 1
        %s198 = scalar_lea.sflag [#allocation5], %s197
        %s199 = sand.u32 %s44, 1
        %s200 = smul.addr %s199, 8
        %s201 = scalar_lea.vmem [#allocation4], %s200
        %p202 = pneg %p57
        %p203 = pneg %p54
        %s204 = sand.u32 %s72, 1
        %s205 = scalar_lea.sflag [#allocation8], %s204
        %s206 = sand.u32 %s72, 1
        %s207 = smul.addr %s206, 8
        %s208 = scalar_lea.vmem [#allocation7], %s207
        %p209 = pneg %p85
        %p210 = pneg %p82
        %p211 = pneg %p111
        %p212 = pneg %p108
        %s213 = sand.u32 %s98, 1
        %s214 = scalar_lea.sflag [#allocation6], %s213
        %s215 = sand.u32 %s98, 1
        %s216 = smul.addr %s215, 8
        %s217 = scalar_lea.vmem [#allocation9], %s216
        %p218 = scmp.eq.s32.totalorder %s27, 0
        // Predicated region
        $region37: #{tpu_custom_call.1} parent=27 // pred_check
          %p219 = pneg %p218
        $region38: #{tpu_custom_call.1} parent=27 // pred_check_branch
          %221 = sbr.rel (%p219) target = $region40
        $region39: #{tpu_custom_call.1} parent=27 // pred_region
          %v222 = vlaneseq
          %vm223 = vcmp.ge.s32.totalorder %v222, 0
          %vm224 = vcmp.lt.s32.totalorder %v222, 512
          %vm225 = vmand %vm223, %vm224
          %226 = vst.msk [vmem:[#allocation2] sm:$0xf] %vm225, 0.0
          %227 = vst.msk [vmem:[#allocation3] sm:$0xf] %vm225, 0.0
        $region40: #{tpu_custom_call.1} parent=27 // pred_fallthru
          _
        %v228 = vld [vmem:[%s183] sm:$0xff]
        %v229 = vxor.u32 %v228, 2147483648
        %v230 = vmul.f32 %v229, 1.442695
        %v231 = vpow.pop %v230
        %v232 = vadd.f32 %v231, 1.0
        %v233 = vrcp.pop %v232
        %v234 = vmul.f32 1.0, %v233
        %v235 = vld [vmem:[%s192] sm:$0xff]
        %v236 = vld [vmem:[#allocation2] sm:$0xf]
        %v237 = vmul.f32 %v234, %v235
        %v239 = vcombine.high %v237, %v237
        %v241 = vunpack.c.l.s4 1983009808
        %v242 = vunpack.c.0.s8 %v241
        %v243 = vlaneseq
        %v244 = vshrl.u32 %v243, 7
        %v245 = vsub.s32 %v242, %v244
        %v246 = vrot.slane %v237, %v245
        %v248 = vunpack.c.l.s4 1983009808
        %v249 = vunpack.c.0.s8 %v248
        %v250 = vlaneseq
        %v251 = vshrl.u32 %v250, 7
        %v252 = vsub.s32 %v249, %v251
        %v253 = vrot.slane %v239, %v252
        %v254 = vcombine.high %v246, %v246
        %v255 = vcombine.high %v253, %v253
        %vm260 = vcmask 1041408
        %v261 = vsel %vm260, %v246, 0.0
        %v262 = vrot.slane %v261, 4
        %v263 = vadd.f32 %v261, %v262
        %v264 = vrot.slane %v263, 2
        %v265 = vadd.f32 %v263, %v264
        %v266 = vrot.slane %v265, 1
        %v267 = vadd.f32 %v265, %v266
        %v268 = vsel %vm260, %v254, 0.0
        %v269 = vrot.slane %v268, 4
        %v270 = vadd.f32 %v268, %v269
        %v271 = vrot.slane %v270, 2
        %v272 = vadd.f32 %v270, %v271
        %v273 = vrot.slane %v272, 1
        %v274 = vadd.f32 %v272, %v273
        %v275 = vsel %vm260, %v253, 0.0
        %v276 = vrot.slane %v275, 4
        %v277 = vadd.f32 %v275, %v276
        %v278 = vrot.slane %v277, 2
        %v279 = vadd.f32 %v277, %v278
        %v280 = vrot.slane %v279, 1
        %v281 = vadd.f32 %v279, %v280
        %v282 = vsel %vm260, %v255, 0.0
        %v283 = vrot.slane %v282, 4
        %v284 = vadd.f32 %v282, %v283
        %v285 = vrot.slane %v284, 2
        %v286 = vadd.f32 %v284, %v285
        %v287 = vrot.slane %v286, 1
        %v288 = vadd.f32 %v286, %v287
        %v293 = vcombine.low %v267, %v274
        %v294 = vcombine.low %v281, %v288
        %v296 = vunpack.c.l.s4 1966171168
        %v297 = vunpack.c.0.s8 %v296
        %v298 = vlaneseq
        %v299 = vshrl.u32 %v298, 7
        %v300 = vsub.s32 %v297, %v299
        %v301 = vrot.slane %v293, %v300
        %v303 = vunpack.c.l.s4 1966171168
        %v304 = vunpack.c.0.s8 %v303
        %v305 = vlaneseq
        %v306 = vshrl.u32 %v305, 7
        %v307 = vsub.s32 %v304, %v306
        %v308 = vrot.slane %v294, %v307
        %v309 = vcombine.low %v301, %v308
        %v311 = vunpack.c.l.s4 1966171168
        %v312 = vunpack.c.0.s8 %v311
        %v313 = vlaneseq
        %v314 = vshrl.u32 %v313, 7
        %v315 = vsub.s32 %v312, %v314
        %v316 = vrot.slane %v309, %v315
        %v318 = vadd.f32 %v236, %v316
        %v319 = vlaneseq
        %vm320 = vcmp.ge.s32.totalorder %v319, 0
        %vm321 = vcmp.lt.s32.totalorder %v319, 512
        %vm322 = vmand %vm320, %vm321
        %323 = vst.msk [vmem:[#allocation2] sm:$0xf] %vm322, %v318
        %v324 = vld [vmem:[#allocation3] sm:$0xf]
        %v325 = vadd.f32 %v234, %v235
        %v327 = vcombine.high %v325, %v325
        %v329 = vunpack.c.l.s4 1983009808
        %v330 = vunpack.c.0.s8 %v329
        %v331 = vlaneseq
        %v332 = vshrl.u32 %v331, 7
        %v333 = vsub.s32 %v330, %v332
        %v334 = vrot.slane %v325, %v333
        %v336 = vunpack.c.l.s4 1983009808
        %v337 = vunpack.c.0.s8 %v336
        %v338 = vlaneseq
        %v339 = vshrl.u32 %v338, 7
        %v340 = vsub.s32 %v337, %v339
        %v341 = vrot.slane %v327, %v340
        %v342 = vcombine.high %v334, %v334
        %v343 = vcombine.high %v341, %v341
        %v348 = vsel %vm260, %v334, 0.0
        %v349 = vrot.slane %v348, 4
        %v350 = vadd.f32 %v348, %v349
        %v351 = vrot.slane %v350, 2
        %v352 = vadd.f32 %v350, %v351
        %v353 = vrot.slane %v352, 1
        %v354 = vadd.f32 %v352, %v353
        %v355 = vsel %vm260, %v342, 0.0
        %v356 = vrot.slane %v355, 4
        %v357 = vadd.f32 %v355, %v356
        %v358 = vrot.slane %v357, 2
        %v359 = vadd.f32 %v357, %v358
        %v360 = vrot.slane %v359, 1
        %v361 = vadd.f32 %v359, %v360
        %v362 = vsel %vm260, %v341, 0.0
        %v363 = vrot.slane %v362, 4
        %v364 = vadd.f32 %v362, %v363
        %v365 = vrot.slane %v364, 2
        %v366 = vadd.f32 %v364, %v365
        %v367 = vrot.slane %v366, 1
        %v368 = vadd.f32 %v366, %v367
        %v369 = vsel %vm260, %v343, 0.0
        %v370 = vrot.slane %v369, 4
        %v371 = vadd.f32 %v369, %v370
        %v372 = vrot.slane %v371, 2
        %v373 = vadd.f32 %v371, %v372
        %v374 = vrot.slane %v373, 1
        %v375 = vadd.f32 %v373, %v374
        %v380 = vcombine.low %v354, %v361
        %v381 = vcombine.low %v368, %v375
        %v383 = vunpack.c.l.s4 1966171168
        %v384 = vunpack.c.0.s8 %v383
        %v385 = vlaneseq
        %v386 = vshrl.u32 %v385, 7
        %v387 = vsub.s32 %v384, %v386
        %v388 = vrot.slane %v380, %v387
        %v390 = vunpack.c.l.s4 1966171168
        %v391 = vunpack.c.0.s8 %v390
        %v392 = vlaneseq
        %v393 = vshrl.u32 %v392, 7
        %v394 = vsub.s32 %v391, %v393
        %v395 = vrot.slane %v381, %v394
        %v396 = vcombine.low %v388, %v395
        %v398 = vunpack.c.l.s4 1966171168
        %v399 = vunpack.c.0.s8 %v398
        %v400 = vlaneseq
        %v401 = vshrl.u32 %v400, 7
        %v402 = vsub.s32 %v399, %v401
        %v403 = vrot.slane %v396, %v402
        %v405 = vadd.f32 %v324, %v403
        %406 = vst.msk [vmem:[#allocation3] sm:$0xf] %vm322, %v405
        // Predicated region
        $region41: #{tpu_custom_call.1} parent=27 // pred_check
          %p407 = pneg %p218
        $region42: #{tpu_custom_call.1} parent=27 // pred_check_branch
          %409 = sbr.rel (%p407) target = $region44
        $region43: #{tpu_custom_call.1} parent=27 // pred_region
          %v410 = vld [vmem:[#allocation2] sm:$0xf]
          %v412 = vlaneseq
          %v413 = vshrl.u32 %v412, 7
          %v414 = vsub.s32 0, %v413
          %v415 = vrot.slane %v410, %v414
          %v416 = vlaneseq
          %v417 = vshrl.u32 %v416, 7
          %v418 = vsub.s32 1, %v417
          %v419 = vrot.slane %v410, %v418
          %v420 = vlaneseq
          %v421 = vshrl.u32 %v420, 7
          %v422 = vsub.s32 2, %v421
          %v423 = vrot.slane %v410, %v422
          %v424 = vlaneseq
          %v425 = vshrl.u32 %v424, 7
          %v426 = vsub.s32 3, %v425
          %v427 = vrot.slane %v410, %v426
          %vm432 = vcmask 1040384
          %v433 = vsel %vm432, %v415, 0.0
          %v434 = vsel %vm432, %v419, 0.0
          %v435 = vadd.f32 %v433, %v434
          %v436 = vsel %vm432, %v423, 0.0
          %v437 = vadd.f32 %v435, %v436
          %v438 = vsel %vm432, %v427, 0.0
          %v439 = vadd.f32 %v437, %v438
          %440 = vadd.xlane.f32.xlu0 %v439
          %v441 = vpop.xlane.xlu0 %440
          %v442 = vrot.slane %v441, 4
          %v443 = vadd.f32 %v441, %v442
          %v444 = vrot.slane %v443, 2
          %v445 = vadd.f32 %v443, %v444
          %v446 = vrot.slane %v445, 1
          %v447 = vadd.f32 %v445, %v446
          %s448 = vtos %v447
          %v449 = vld [vmem:[#allocation3] sm:$0xf]
          %v451 = vlaneseq
          %v452 = vshrl.u32 %v451, 7
          %v453 = vsub.s32 0, %v452
          %v454 = vrot.slane %v449, %v453
          %v455 = vlaneseq
          %v456 = vshrl.u32 %v455, 7
          %v457 = vsub.s32 1, %v456
          %v458 = vrot.slane %v449, %v457
          %v459 = vlaneseq
          %v460 = vshrl.u32 %v459, 7
          %v461 = vsub.s32 2, %v460
          %v462 = vrot.slane %v449, %v461
          %v463 = vlaneseq
          %v464 = vshrl.u32 %v463, 7
          %v465 = vsub.s32 3, %v464
          %v466 = vrot.slane %v449, %v465
          %v471 = vsel %vm432, %v454, 0.0
          %v472 = vsel %vm432, %v458, 0.0
          %v473 = vadd.f32 %v471, %v472
          %v474 = vsel %vm432, %v462, 0.0
          %v475 = vadd.f32 %v473, %v474
          %v476 = vsel %vm432, %v466, 0.0
          %v477 = vadd.f32 %v475, %v476
          %478 = vadd.xlane.f32.xlu0 %v477
          %v479 = vpop.xlane.xlu0 %478
          %v480 = vrot.slane %v479, 4
          %v481 = vadd.f32 %v479, %v480
          %v482 = vrot.slane %v481, 2
          %v483 = vadd.f32 %v481, %v482
          %v484 = vrot.slane %v483, 1
          %v485 = vadd.f32 %v483, %v484
          %s486 = vtos %v485
          %s487 = smul.f32 %s448, 2.0
          %s488 = sadd.f32 %s487, 1e-05
          %s489 = sadd.f32 %s486, 1e-05
          %v490 = vstv %s489
          %v491 = vrcp.pop %v490
          %s492 = vtos %v491
          %s493 = smul.f32 %s488, %s492
          %v494 = vstv %s493
          %495 = vst [vmem:[%s217] sm:$0xff] %v494
        $region44: #{tpu_custom_call.1} parent=27 // pred_fallthru
          _
        %s496 = sand.u32 %s98, 1
        %s497 = scalar_lea.sflag [#allocation6], %s496
        %s498 = sand.u32 %s98, 1
        %s499 = smul.addr %s498, 8
        %s500 = scalar_lea.vmem [#allocation9], %s499
        // Predicated region
        $region45: #{tpu_custom_call.1} parent=27 // pred_check
          %p501 = pneg %p108
        $region46: #{tpu_custom_call.1} parent=27 // pred_check_branch
          %503 = sbr.rel (%p501) target = $region48
        $region47: #{tpu_custom_call.1} parent=27 // pred_region
          %s505 = ssub.s32 128, 128
          %506 = vsyncadd %s497, %s505
          %s507 = smul.addr %s26, 128
          %s508 = scalar_lea.hbm %s2, %s507
          %s510 = sshll.u32 %s500, 4
          %s511 = int_to_ptr.vmem [resolvable:$true] %s510
          %513 = dma.vmem_to_hbm [thread:$0]  %s511, 128, %s508, %s497
        $region48: #{tpu_custom_call.1} parent=27 // pred_fallthru
          _
      $region28: #{tpu_custom_call.1} parent=5 // pred_fallthru
        _
      %p514 = scmp.le.s32.totalorder 2, %s17
      // Predicated region
      $region49: #{tpu_custom_call.1} parent=5 // pred_check
        %p515 = pneg %p514
      $region50: #{tpu_custom_call.1} parent=5 // pred_check_branch
        %517 = sbr.rel (%p515) target = $region52
      $region51: #{tpu_custom_call.1} parent=5 // pred_region
        %s518 = ssub.s32 %s17, 2
        // Predicated region
        $region53: #{tpu_custom_call.1} parent=51 // pred_check
          %p519 = pneg %p114
        $region54: #{tpu_custom_call.1} parent=51 // pred_check_branch
          %521 = sbr.rel (%p519) target = $region56
        $region55: #{tpu_custom_call.1} parent=51 // pred_region
          %s522 = sand.u32 %s99, 1
          %s523 = scalar_lea.sflag [#allocation6], %s522
          %s524 = sand.u32 %s99, 1
          %s525 = smul.addr %s524, 8
          %s526 = scalar_lea.vmem [#allocation9], %s525
          %527 = dma.done %s523, 128
        $region56: #{tpu_custom_call.1} parent=51 // pred_fallthru
          _
      $region52: #{tpu_custom_call.1} parent=5 // pred_fallthru
        _
    $region6: #{tpu_custom_call.1} parent=1 // loop_footer
      %s21 = sadd.s32 1, %s17
    $region7: #{tpu_custom_call.1} parent=1 // loop_footer_branch
      %16 = sbr.rel target = $region3
    $region8: #{tpu_custom_call.1} parent=1 // loop_exit
      _
    %528 = vsyncpa [#allocation5], 1
    %s529 = scalar_lea.sflag [#allocation5], 1
    %530 = vsyncpa %s529, 1
    %531 = vsyncpa [#allocation8], 1
    %s532 = scalar_lea.sflag [#allocation8], 1
    %533 = vsyncpa %s532, 1
    %534 = vsyncpa [#allocation6], 1
    %s535 = scalar_lea.sflag [#allocation6], 1
    %536 = vsyncpa %s535, 1

</llo_original>
